<compile_context>
chip_gen: v7x
topology: tpu7x:2x2x1
jax: 0.10.0
libtpu: 0.0.40
codegen_flags: <defaults>
</compile_context>

<pallas_src>
import math

import jax
import jax.numpy as jnp
from jax.experimental import pallas as pl
from jax.experimental.pallas import tpu as pltpu


_TILE_CAP_BYTES = 3 << 20     # ~3 MiB per streamed (packed) block
_SMALL_ROW_LIMIT = 1024       # <= this many (B, 24) rows -> single VMEM block


def _mul_kernel(x_ref, w_ref, o_ref):
    # w_ref is (1, F); index the single row so the broadcast is a plain
    # row-vector * matrix VPU multiply.
    o_ref[...] = x_ref[...] * w_ref[0, :]


def _single_block_call(x, w):
    # Whole arrays as one block (block_shape == full shape satisfies TPU tiling).
    return pl.pallas_call(
        _mul_kernel,
        out_shape=jax.ShapeDtypeStruct(x.shape, x.dtype),
        in_specs=[
            pl.BlockSpec(x.shape, lambda: (0, 0)),
            pl.BlockSpec(w.shape, lambda: (0, 0)),
        ],
        out_specs=pl.BlockSpec(x.shape, lambda: (0, 0)),
    )(x, w)


def _tiled_call(x, w, tile_rows, *, input_buffers=2):
    rows, f = x.shape
    itemsize = jnp.dtype(x.dtype).itemsize
    x_spec_kwargs = {}
    if input_buffers > 2:
        # Third input buffer hides first-block latency / DMA jitter on this
        # pure-streaming kernel.
        x_spec_kwargs["pipeline_mode"] = pl.Buffered(input_buffers)
    return pl.pallas_call(
        _mul_kernel,
        out_shape=jax.ShapeDtypeStruct((rows, f), x.dtype),
        grid_spec=pltpu.PrefetchScalarGridSpec(
            num_scalar_prefetch=0,
            grid=(pl.cdiv(rows, tile_rows),),
            in_specs=[
                pl.BlockSpec((tile_rows, f), lambda i: (i, 0), **x_spec_kwargs),
                # Weight stays resident in VMEM: same (0, 0) block every step.
                pl.BlockSpec((1, f), lambda i: (0, 0)),
            ],
            out_specs=pl.BlockSpec((tile_rows, f), lambda i: (i, 0)),
        ),
        compiler_params=pltpu.CompilerParams(
            dimension_semantics=("parallel",),   # megacore sharding on v7x
            vmem_limit_bytes=32 << 20,           # fits v5e/v6e/v7x scoped limits
        ),
        cost_estimate=pl.CostEstimate(
            flops=rows * f,
            transcendentals=0,
            bytes_accessed=2 * rows * f * itemsize,
        ),
    )(x, w)


def _pack_factor(f):
    # Smallest k such that k*f is a multiple of 128 lanes.
    return 128 // math.gcd(f, 128)


def _sublane_align(dtype):
    # f32 -> 8, bf16 -> 16, int8/fp8 -> 32 row multiples for packed block shapes.
    return 8 * (4 // jnp.dtype(dtype).itemsize)


def _num_tensorcores():
    try:
        kind = jax.devices()[0].device_kind.lower()
        if "v7" in kind:
            return 2
    except Exception:
        pass
    return 1


def _pick_tile_rows(rows, packed_f, dtype, n_cores):
    itemsize = jnp.dtype(dtype).itemsize
    align = _sublane_align(dtype)
    cap = max(align, (_TILE_CAP_BYTES // (packed_f * itemsize) // align) * align)
    steps = pl.cdiv(rows, cap)
    if n_cores > 1:
        # v7x: prefer >= 4 steps per core and an even grid so both TensorCores
        # stay busy — but never shrink blocks below ~512 packed rows (~0.75 MiB)
        # where per-step overhead starts to bite.
        min_steps = 4 * n_cores
        if rows >= min_steps * 512:
            steps = max(steps, min_steps)
        elif rows >= 2 * align:
            steps = max(steps, n_cores)
        if steps > 1 and steps % n_cores:
            steps += n_cores - steps % n_cores
    tile = pl.cdiv(rows, steps)
    tile = min(cap, max(align, ((tile + align - 1) // align) * align))
    return tile


def weighted_mul(x: jax.Array, w: jax.Array) -> jax.Array:
    """Computes x * w with w of shape (1, F) broadcasting over the batch of x (B, F)."""
    assert w.ndim == 2 and w.shape[0] == 1
    assert x.ndim == 2 and x.shape[-1] == w.shape[-1]
    dtype = jnp.promote_types(x.dtype, w.dtype)
    x = x.astype(dtype)
    w = w.astype(dtype)
    b, f = x.shape

    pack = _pack_factor(f)
    packed_f = pack * f

    # Small, non-packable batch (e.g. B=2): everything fits trivially in VMEM;
    # launch overhead dominates, so don't bother repacking.
    if b <= _SMALL_ROW_LIMIT and b % pack != 0:
        return _single_block_call(x, w)

    # Lane-dense packed path for everything else.  Pad the batch up to a
    # multiple of `pack` (at most pack-1 extra rows) so the reshape is legal —
    # this keeps big non-divisible batches off the whole-array VMEM block.
    b_pad = pl.cdiv(b, pack) * pack
    if b_pad != b:
        x = jnp.pad(x, ((0, b_pad - b), (0, 0)))
    rows = b_pad // pack
    x_p = x.reshape(rows, packed_f)
    w_p = jnp.tile(w, (1, pack))          # (1, packed_f); built once, outside kernel

    if rows <= 8:
        out_p = _single_block_call(x_p, w_p)
    else:
        tile_rows = _pick_tile_rows(rows, packed_f, dtype, _num_tensorcores())
        steps = pl.cdiv(rows, tile_rows)
        try:
            out_p = _tiled_call(x_p, w_p, tile_rows,
                                input_buffers=3 if steps >= 4 else 2)
        except Exception:
            # pipeline_mode/Buffered unsupported on this jax version -> default
            # double buffering.
            out_p = _tiled_call(x_p, w_p, tile_rows, input_buffers=2)

    out = out_p.reshape(b_pad, f)
    if b_pad != b:
        out = out[:b]
    return out


if __name__ == "__main__":
    key = jax.random.PRNGKey(0)
    k_w, k_x, k_x2, k_x3 = jax.random.split(key, 4)

    F = 2 * 3 * 4  # 24 features, matching the module's (1, 24) parameter
    weight = jax.random.normal(k_w, (1, F), dtype=jnp.float32) + 0.01

    # Small input consistent with the module: batch of 2 rows of 24 features.
    x_small = jax.random.normal(k_x, (2, F), dtype=jnp.float32)
    out_small = weighted_mul(x_small, weight)
    jax.block_until_ready(out_small)
    assert out_small.shape == (2, F)
    assert jnp.allclose(out_small, x_small * weight, atol=1e-6, rtol=1e-6)

    # Large, evenly packable batch: lane-dense tiled streaming path.
    x_big = jax.random.normal(k_x2, (32768, F), dtype=jnp.float32)
    out_big = weighted_mul(x_big, weight)
    jax.block_until_ready(out_big)
    assert jnp.allclose(out_big, x_big * weight, atol=1e-6, rtol=1e-6)

    # Large batch NOT divisible by the pack factor: padded lane-dense path
    # (previously fell back to a single whole-array VMEM block).
    x_odd = jax.random.normal(k_x3, (32773, F), dtype=jnp.float32)
    out_odd = weighted_mul(x_odd, weight)
    jax.block_until_ready(out_odd)
    assert jnp.allclose(out_odd, x_odd * weight, atol=1e-6, rtol=1e-6)

    # bf16 exercises the dtype-aware (16-row) sublane alignment.
    x_bf = x_big[:4099].astype(jnp.bfloat16)
    w_bf = weight.astype(jnp.bfloat16)
    out_bf = weighted_mul(x_bf, w_bf)
    jax.block_until_ready(out_bf)
    assert jnp.allclose(out_bf.astype(jnp.float32),
                        (x_bf * w_bf).astype(jnp.float32), atol=1e-2, rtol=1e-2)

    print("KERNEL_OK")
</pallas_src>

<mosaic_0001>
module attributes {stable_mosaic.version = 11 : i64} {
  func.func @_mul_kernel(%arg0: memref<2x24xf32, #tpu.memory_space<vmem>>, %arg1: memref<1x24xf32, #tpu.memory_space<vmem>>, %arg2: memref<2x24xf32, #tpu.memory_space<vmem>>) attributes {dimension_semantics = [], scalar_prefetch = 0 : i64, scratch_operands = 0 : i64, tpu.core_type = #tpu.core_type<tc>} {
    %c0 = arith.constant 0 : index
    %c0_0 = arith.constant 0 : index
    %0 = vector.load %arg0[%c0, %c0_0] : memref<2x24xf32, #tpu.memory_space<vmem>>, vector<2x24xf32>
    %c0_1 = arith.constant 0 : index
    %c0_2 = arith.constant 0 : index
    %1 = vector.load %arg1[%c0_1, %c0_2] : memref<1x24xf32, #tpu.memory_space<vmem>>, vector<1x24xf32>
    %2 = vector.shape_cast %1 : vector<1x24xf32> to vector<24xf32>
    %3 = vector.shape_cast %2 : vector<24xf32> to vector<1x24xf32>
    %4 = vector.broadcast %3 : vector<1x24xf32> to vector<2x24xf32>
    %5 = arith.mulf %0, %4 : vector<2x24xf32>
    %c0_3 = arith.constant 0 : index
    %c0_4 = arith.constant 0 : index
    %6 = vector.load %arg2[%c0_3, %c0_4] : memref<2x24xf32, #tpu.memory_space<vmem>>, vector<2x24xf32>
    tpu.vector_store %arg2[%c0_3, %c0_4], %5 {strides = array<i32>} : memref<2x24xf32, #tpu.memory_space<vmem>>, vector<2x24xf32>,
    return
  }
}

</mosaic_0001>

<llo_original>
// kernel: tpu_custom_call.1
$region0: #{tpu_custom_call.1}
  #allocation0 [shape = 'u32[]', space=smem, size = 0x4, offset = 0x4, fixed_abs, tag = 'smem constant byte address 0x4 - core index']
  #allocation1 [shape = 'u32[144,128]{1,0:T(1,128)}', space=vmem, size = 0x12000, scoped, tag = 'internal scratch']
  %s0 = inlined_call_operand.hbm [shape: f32[2,24], index: 0, kind: input, shape index: {}]
  %s1 = inlined_call_operand.vmem [shape: f32[1,24], index: 1, kind: input, shape index: {}]
  %s2 = inlined_call_operand.hbm [shape: f32[2,24], index: 2, kind: output, shape index: {}]
  %s3 = sld [smem:[#allocation0]]
  $region22: #{tpu_custom_call.1} parent=0
    _
  %s5 = ssub.s32 1, %s3
  %s6 = scalar_select 0, %s5, %s3
  $region1: #{tpu_custom_call.1} parent=0
    #allocation2 [shape = 'u8[1024]{0}', space=vmem, size = 0x400, scoped, tag = 'input window, operand 0, single buffered']
    #allocation3 [shape = 's32[1]{0}', space=sflag, size = 0x4, scoped, tag = 'scoped memory for tpu_custom_call.1']
    #allocation4 [shape = 's32[1]{0}', space=sflag, size = 0x4, scoped, tag = 'scoped memory for tpu_custom_call.1']
    #allocation5 [shape = 'u8[1024]{0}', space=vmem, size = 0x400, scoped, tag = 'output window, operand 0, single buffered']
    %7 = vsyncpa [#allocation3], 0
    %8 = vsyncpa [#allocation4], 0
    // Predicated region
    $region2: #{tpu_custom_call.1} parent=1 // pred_check
      _
    $region3: #{tpu_custom_call.1} parent=1 // pred_check_branch
      %10 = sbr.rel (0) target = $region5
    $region4: #{tpu_custom_call.1} parent=1 // pred_region
      %s12 = ssub.s32 32, 32
      %13 = vsyncadd [#allocation3], %s12
      %s15 = sshll.u32 [#allocation2], 4
      %s16 = int_to_ptr.vmem [resolvable:$true] %s15
      %18 = dma.hbm_to_vmem [thread:$0]  %s0, 32, %s16, [#allocation3]
    $region5: #{tpu_custom_call.1} parent=1 // pred_fallthru
      _
    // Predicated region
    $region6: #{tpu_custom_call.1} parent=1 // pred_check
      _
    $region7: #{tpu_custom_call.1} parent=1 // pred_check_branch
      %20 = sbr.rel (0) target = $region9
    $region8: #{tpu_custom_call.1} parent=1 // pred_region
      _
    $region9: #{tpu_custom_call.1} parent=1 // pred_fallthru
      _
    // Predicated region
    $region10: #{tpu_custom_call.1} parent=1 // pred_check
      _
    $region11: #{tpu_custom_call.1} parent=1 // pred_check_branch
      %22 = sbr.rel (0) target = $region13
    $region12: #{tpu_custom_call.1} parent=1 // pred_region
      %23 = dma.done [#allocation3], 32
    $region13: #{tpu_custom_call.1} parent=1 // pred_fallthru
      _
    %v24 = vld [vmem:[#allocation2] sm:$0x3]
    %v25 = vld [vmem:[%s1] sm:$0x1]
    %v27 = vlaneseq
    %v28 = vshrl.u32 %v27, 7
    %v29 = vsub.s32 0, %v28
    %v30 = vrot.slane %v25, %v29
    %v32 = vmul.f32 %v24, %v30
    %vm33 = vcmask 189440
    %34 = vst.msk [vmem:[#allocation5] sm:$0x3] %vm33, %v32
    // Predicated region
    $region14: #{tpu_custom_call.1} parent=1 // pred_check
      _
    $region15: #{tpu_custom_call.1} parent=1 // pred_check_branch
      %36 = sbr.rel (0) target = $region17
    $region16: #{tpu_custom_call.1} parent=1 // pred_region
      %s38 = ssub.s32 32, 32
      %39 = vsyncadd [#allocation4], %s38
      %s41 = sshll.u32 [#allocation5], 4
      %s42 = int_to_ptr.vmem [resolvable:$true] %s41
      %44 = dma.vmem_to_hbm [thread:$0]  %s42, 32, %s2, [#allocation4]
    $region17: #{tpu_custom_call.1} parent=1 // pred_fallthru
      _
    // Predicated region
    $region18: #{tpu_custom_call.1} parent=1 // pred_check
      _
    $region19: #{tpu_custom_call.1} parent=1 // pred_check_branch
      %46 = sbr.rel (0) target = $region21
    $region20: #{tpu_custom_call.1} parent=1 // pred_region
      %47 = dma.done [#allocation4], 32
    $region21: #{tpu_custom_call.1} parent=1 // pred_fallthru
      _
    %48 = vsyncpa [#allocation3], 1
    %49 = vsyncpa [#allocation4], 1

</llo_original>
